<compile_context>
chip_gen: v7x
topology: tpu7x:2x2x1
jax: 0.10.0
libtpu: 0.0.40
codegen_flags: <defaults>
</compile_context>

<pallas_src>
import jax
import jax.numpy as jnp
import numpy as np
from jax import lax
from jax.experimental import pallas as pl
from jax.experimental.pallas import tpu as pltpu


# ---------------------------------------------------------------------------
# Fused Pallas kernel: up(x2) ++ x1 -> conv1 + ReLU -> conv2 + ReLU
# (Bt images per grid step; the intermediate never leaves VMEM/vregs.)
# ---------------------------------------------------------------------------
def _unet_up_kernel(x1_ref, x2_ref, ay_ref, rhs1_ref, bias1_ref,
                    rhs2_ref, bias2_ref, o_ref):
    # x1_ref  : (Bt, H, W*C1)           bf16 skip connection (NHWC, W,C on lanes)
    # x2_ref  : (Bt, Hs, Ws*C2)         bf16 low-res features (pre-upsample)
    # ay_ref  : (H+2, Hs)               bf16 row-interp matrix (rows 0/H+1 zero)
    # rhs1_ref: (3*W*C1 + 3*Ws*C2, W*Co) bf16 merged conv1 weights
    #           (halo-free band; width upsample folded into the x2 part)
    # bias1   : (1, W*Co)               f32
    # rhs2_ref: (3*W*Co, W*Co)          bf16 merged conv2 weights
    # bias2   : (1, W*Co)               f32
    # o_ref   : (Bt, H, W*Co)           bf16 lane-dense output tile
    Bt, H, WC1 = x1_ref.shape
    WCo = o_ref.shape[2]

    ay = ay_ref[...]                             # (H+2, Hs)
    z1 = jnp.zeros((1, WC1), jnp.bfloat16)       # 1-row halos built as values:
    zo = jnp.zeros((1, WCo), jnp.bfloat16)       # no scratch, no slab zeroing

    # ---- conv1 as ONE merged matmul over the whole sub-batch ----
    # Per image, LHS row h is
    #   [x1p[h] | x1p[h+1] | x1p[h+2] | v[h] | v[h+1] | v[h+2]]
    # where x1p is the row-padded skip input and v = Ay_pad @ x2 is the
    # height-upsampled x2 (the width upsample lives inside rhs1).  The channel
    # concat of the PyTorch module is implicit in this lane ordering.
    lhs1_rows = []
    for b in range(Bt):
        v = jnp.dot(ay, x2_ref[b],
                    preferred_element_type=jnp.float32).astype(jnp.bfloat16)
        x1p = jnp.concatenate([z1, x1_ref[b], z1], axis=0)       # (H+2, W*C1)
        lhs1_rows.append(jnp.concatenate(
            [x1p[0:H], x1p[1:H + 1], x1p[2:H + 2],
             v[0:H], v[1:H + 1], v[2:H + 2]], axis=1))
    lhs1 = jnp.concatenate(lhs1_rows, axis=0)                    # (Bt*H, K1)
    y = jnp.dot(lhs1, rhs1_ref[...], preferred_element_type=jnp.float32)
    y = jnp.maximum(y + bias1_ref[...], 0.0)                     # (Bt*H, W*Co)

    # ---- conv2: intermediate stays on-chip, one merged matmul ----
    yb = y.astype(jnp.bfloat16)
    lhs2_rows = []
    for b in range(Bt):
        yp = jnp.concatenate([zo, yb[b * H:(b + 1) * H], zo], axis=0)
        lhs2_rows.append(jnp.concatenate(
            [yp[0:H], yp[1:H + 1], yp[2:H + 2]], axis=1))
    lhs2 = jnp.concatenate(lhs2_rows, axis=0)                    # (Bt*H, 3*W*Co)
    out = jnp.dot(lhs2, rhs2_ref[...], preferred_element_type=jnp.float32)
    out = jnp.maximum(out + bias2_ref[...], 0.0)

    # Lane-dense (last dim = W*Co = 128 here) unmasked bf16 store.
    o_ref[...] = out.reshape(Bt, H, WCo).astype(o_ref.dtype)


# ---------------------------------------------------------------------------
# One-time, host-side weight preparation (hoisted out of the forward)
# ---------------------------------------------------------------------------
def _interp_matrix(n_in, n_out):
    """1-D bilinear sampling matrix (n_out, n_in), align_corners=True."""
    if n_in == 1:
        return np.ones((n_out, 1), np.float32)
    s = np.arange(n_out, dtype=np.float64) * ((n_in - 1) / (n_out - 1))
    lo = np.floor(s).astype(np.int64)
    hi = np.minimum(lo + 1, n_in - 1)
    f = (s - lo).astype(np.float32)
    m = np.zeros((n_out, n_in), np.float32)
    m[np.arange(n_out), lo] += 1.0 - f
    m[np.arange(n_out), hi] += f
    return m


def _band_weights(w_hwio, W):
    """(3, 3, Cin, Cout) -> (3, W*Cin, W*Cout) halo-free block-banded weights.

    B[dy, x*Cin+ci, w*Cout+co] = w[dy, x-w+1, ci, co] for x-w+1 in {0,1,2} and
    0 <= x < W.  Out-of-range taps are simply dropped (they multiply the zero
    padding), so the activations need NO lane halo and sit at lane offset 0.
    """
    KH, KW, Cin, Cout = w_hwio.shape
    B = np.zeros((KH, W * Cin, W * Cout), np.float32)
    for w in range(W):
        for dx in range(KW):
            x = w + dx - 1
            if 0 <= x < W:
                B[:, x * Cin:(x + 1) * Cin, w * Cout:(w + 1) * Cout] = \
                    w_hwio[:, dx]
    return B


def prepare_params(params, *, skip_channels, height, width):
    """Build kernel-ready weights ONCE (call outside jit, at param-prep time).

    Folds: halo-free banding for both convs, the width half of the 2x bilinear
    upsample into conv1's x2 weights, the bias tiling along W, and the
    row-padded height interpolation matrix.
    """
    C1, H, W = skip_channels, height, width
    Hs, Ws = H // 2, W // 2
    w1 = np.asarray(params["w1"], np.float32)             # (3, 3, C1+C2, Cout)
    w2 = np.asarray(params["w2"], np.float32)             # (3, 3, Cout, Cout)
    b1 = np.asarray(params["b1"], np.float32)
    b2 = np.asarray(params["b2"], np.float32)
    C2 = w1.shape[2] - C1
    Cout = w1.shape[3]

    band1a = _band_weights(w1[:, :, :C1, :], W)            # (3, W*C1,  W*Cout)
    band1b = _band_weights(w1[:, :, C1:, :], W)            # (3, W*C2,  W*Cout)
    band2 = _band_weights(w2, W)                           # (3, W*Cout, W*Cout)

    # Fold the width interpolation (align_corners=True) into the x2 weights:
    #   (v_row @ AxC) @ B == v_row @ (AxC @ B), AxC = Ax^T (x) I_C2.
    AxC = np.kron(_interp_matrix(Ws, W).T, np.eye(C2, dtype=np.float32))
    band1b = np.einsum('uk,dkn->dun', AxC, band1b)          # (3, Ws*C2, W*Cout)

    rhs1 = np.concatenate([band1a[0], band1a[1], band1a[2],
                           band1b[0], band1b[1], band1b[2]], axis=0)
    rhs2 = np.concatenate([band2[0], band2[1], band2[2]], axis=0)

    ay_pad = np.zeros((H + 2, Hs), np.float32)              # rows 0 / H+1 stay
    ay_pad[1:H + 1] = _interp_matrix(Hs, H)                 # zero (row halo)

    return {
        "rhs1": jnp.asarray(rhs1, jnp.bfloat16),
        "rhs2": jnp.asarray(rhs2, jnp.bfloat16),
        "ay_pad": jnp.asarray(ay_pad, jnp.bfloat16),
        "bias1": jnp.asarray(np.tile(b1, W)[None, :], jnp.float32),
        "bias2": jnp.asarray(np.tile(b2, W)[None, :], jnp.float32),
    }


# ---------------------------------------------------------------------------
# unetUp forward
# ---------------------------------------------------------------------------
def _images_per_step(N, H, target_rows=128):
    """Fold batch into matmul M: aim for >=128 LHS rows per grid step."""
    bt = max(1, min(N, max(1, target_rows // max(H, 1))))
    while N % bt:
        bt -= 1
    return bt


def unet_up_forward(inputs1_nchw, inputs2_nchw, prep):
    """inputs1: (N, C1, H, W); inputs2: (N, C2, H/2, W/2). Returns NCHW bf16."""
    N, C1, H, W = inputs1_nchw.shape
    N2, C2, Hs, Ws = inputs2_nchw.shape
    assert N2 == N and 2 * Hs == H and 2 * Ws == W
    Cout = prep["bias1"].shape[1] // W
    K1 = 3 * W * C1 + 3 * Ws * C2
    assert prep["rhs1"].shape == (K1, W * Cout)
    assert prep["rhs2"].shape == (3 * W * Cout, W * Cout)
    assert prep["ay_pad"].shape == (H + 2, Hs)

    # NCHW -> NHWC with (W, C) flattened onto the lane axis; bf16 MXU operands.
    # TODO(synk): if the surrounding UNet is NHWC end-to-end, drop these
    # boundary transposes (and the final one) entirely.
    x1f = jnp.transpose(inputs1_nchw, (0, 2, 3, 1)).reshape(N, H, W * C1)
    x2f = jnp.transpose(inputs2_nchw, (0, 2, 3, 1)).reshape(N, Hs, Ws * C2)
    x1f = x1f.astype(jnp.bfloat16)
    x2f = x2f.astype(jnp.bfloat16)

    Bt = _images_per_step(N, H)
    # NOTE(v7x): with a tiny batch this can collapse the grid to one step and
    # leave the second TensorCore idle; choose Bt <= N // 2 there when N >= 2.

    out_flat = pl.pallas_call(
        _unet_up_kernel,
        out_shape=jax.ShapeDtypeStruct((N, H, W * Cout), jnp.bfloat16),
        grid=(N // Bt,),
        in_specs=[
            pl.BlockSpec((Bt, H, W * C1), lambda n: (n, 0, 0)),
            pl.BlockSpec((Bt, Hs, Ws * C2), lambda n: (n, 0, 0)),
            # Constant blocks (interp matrix / weights / biases): the block
            # index never changes so they are fetched once.  pipeline_mode=
            # pl.Buffered(1) would also drop their second buffer; negligible
            # at these sizes so left at the default.
            pl.BlockSpec((H + 2, Hs), lambda n: (0, 0)),
            pl.BlockSpec((K1, W * Cout), lambda n: (0, 0)),
            pl.BlockSpec((1, W * Cout), lambda n: (0, 0)),
            pl.BlockSpec((3 * W * Cout, W * Cout), lambda n: (0, 0)),
            pl.BlockSpec((1, W * Cout), lambda n: (0, 0)),
        ],
        out_specs=pl.BlockSpec((Bt, H, W * Cout), lambda n: (n, 0, 0)),
        compiler_params=pltpu.CompilerParams(
            dimension_semantics=("parallel",),
            vmem_limit_bytes=32 * 1024 * 1024),
    )(x1f, x2f, prep["ay_pad"], prep["rhs1"], prep["bias1"],
      prep["rhs2"], prep["bias2"])

    # TODO(synk): at real decoder sizes the banded weights grow O(W^2*Cin*Cout)
    # (won't fit v7x's 64 MiB VMEM): W-tile the band (per-tile weights, 1-col
    # halo) or switch to a lane-shifted-activation formulation, and pick the
    # W-tile so W_tile*Cout is a multiple of 256 on v6e/v7x (128 on v5e).
    out = out_flat.reshape(N, H, W, Cout)
    return jnp.transpose(out, (0, 3, 1, 2))      # NHWC -> NCHW (module API)


def init_params(key, in_size, out_size, dtype=jnp.float32):
    """Deterministic parameter init (kaiming-uniform-like fan-in scaling)."""
    k1, k2, k3, k4 = jax.random.split(key, 4)
    lim1 = 1.0 / jnp.sqrt(in_size * 9)
    lim2 = 1.0 / jnp.sqrt(out_size * 9)
    # weights stored HWIO: (3, 3, Cin, Cout)
    w1 = jax.random.uniform(k1, (3, 3, in_size, out_size), dtype, -lim1, lim1)
    b1 = jax.random.uniform(k2, (out_size,), dtype, -lim1, lim1)
    w2 = jax.random.uniform(k3, (3, 3, out_size, out_size), dtype, -lim2, lim2)
    b2 = jax.random.uniform(k4, (out_size,), dtype, -lim2, lim2)
    return {"w1": w1, "b1": b1, "w2": w2, "b2": b2}


# ---------------------------------------------------------------------------
# Pure-JAX f32 reference (gather lerp upsample + lax conv) for a sanity check
# ---------------------------------------------------------------------------
def _reference_forward(inputs1_nchw, inputs2_nchw, params):
    x1 = jnp.transpose(inputs1_nchw, (0, 2, 3, 1))
    x2 = jnp.transpose(inputs2_nchw, (0, 2, 3, 1))
    _, Hs, Ws, _ = x2.shape
    H, W = 2 * Hs, 2 * Ws
    sy = jnp.arange(H, dtype=jnp.float32) * (Hs - 1) / (H - 1)
    sx = jnp.arange(W, dtype=jnp.float32) * (Ws - 1) / (W - 1)
    y0 = jnp.floor(sy).astype(jnp.int32); y1 = jnp.minimum(y0 + 1, Hs - 1)
    x0 = jnp.floor(sx).astype(jnp.int32); x1i = jnp.minimum(x0 + 1, Ws - 1)
    wy = (sy - y0)[None, :, None, None]
    wx = (sx - x0)[None, None, :, None]
    rows = x2[:, y0] * (1.0 - wy) + x2[:, y1] * wy
    up = rows[:, :, x0] * (1.0 - wx) + rows[:, :, x1i] * wx
    x = jnp.concatenate([x1, up], axis=-1)

    def conv_relu(x, w, b):
        y = lax.conv_general_dilated(
            x, w, window_strides=(1, 1), padding='SAME',
            dimension_numbers=('NHWC', 'HWIO', 'NHWC'),
            precision=lax.Precision.HIGHEST)
        return jnp.maximum(y + b, 0.0)

    x = conv_relu(x, params["w1"], params["b1"])
    x = conv_relu(x, params["w2"], params["b2"])
    return jnp.transpose(x, (0, 3, 1, 2))


if __name__ == "__main__":
    key = jax.random.PRNGKey(0)
    k_in1, k_in2, k_par = jax.random.split(key, 3)

    # Small UNet-decoder-style shapes (NCHW, matching the PyTorch convention).
    N, C1, H, W = 2, 4, 16, 16
    C2 = 8
    in_size = C1 + C2        # channels after (implicit) concat = 12
    out_size = 8             # -> W*Cout = 128 (lane-dense output)

    inputs1 = jax.random.normal(k_in1, (N, C1, H, W), jnp.float32)
    inputs2 = jax.random.normal(k_in2, (N, C2, H // 2, W // 2), jnp.float32)
    params = init_params(k_par, in_size, out_size)

    # One-time weight prep (banding, upsample fold, bias tiling) -- hoisted out
    # of the per-call forward per the performance review.
    prep = prepare_params(params, skip_channels=C1, height=H, width=W)

    fwd = jax.jit(unet_up_forward)
    out = jax.block_until_ready(fwd(inputs1, inputs2, prep))

    assert out.shape == (N, out_size, H, W), out.shape
    assert bool(jnp.all(out >= 0)), "ReLU output must be non-negative"

    # Numerical check: compare against an f32 reference whose inputs/conv
    # weights are rounded to bf16 (matching the kernel's operand precision),
    # with a tighter relative tolerance than before.
    ref_params = dict(params)
    ref_params["w1"] = params["w1"].astype(jnp.bfloat16).astype(jnp.float32)
    ref_params["w2"] = params["w2"].astype(jnp.bfloat16).astype(jnp.float32)
    ref = _reference_forward(
        inputs1.astype(jnp.bfloat16).astype(jnp.float32),
        inputs2.astype(jnp.bfloat16).astype(jnp.float32),
        ref_params)
    err = float(jnp.max(jnp.abs(out.astype(jnp.float32) - ref)))
    scale = float(jnp.max(jnp.abs(ref)))
    assert err <= 0.04 * scale + 5e-3, f"max abs err {err} (ref scale {scale})"

    print("KERNEL_OK")
</pallas_src>

<mosaic_0001>
module attributes {stable_mosaic.version = 11 : i64} {
  func.func @_unet_up_kernel(%arg0: i32, %arg1: memref<2x16x64xbf16, #tpu.memory_space<vmem>>, %arg2: memref<2x8x64xbf16, #tpu.memory_space<vmem>>, %arg3: memref<18x8xbf16, #tpu.memory_space<vmem>>, %arg4: memref<384x128xbf16, #tpu.memory_space<vmem>>, %arg5: memref<1x128xf32, #tpu.memory_space<vmem>>, %arg6: memref<384x128xbf16, #tpu.memory_space<vmem>>, %arg7: memref<1x128xf32, #tpu.memory_space<vmem>>, %arg8: memref<2x16x128xbf16, #tpu.memory_space<vmem>>) attributes {dimension_semantics = [#tpu.dimension_semantics<parallel>], iteration_bounds = array<i64: 1>, scalar_prefetch = 0 : i64, scratch_operands = 0 : i64, tpu.core_type = #tpu.core_type<tc>, window_params = [{transform_indices = @transform_0, window_bounds = array<i64: 2, 16, 64>}, {transform_indices = @transform_1, window_bounds = array<i64: 2, 8, 64>}, {pipeline_mode = #tpu.pipeline_mode<synchronous>, transform_indices = @transform_2, window_bounds = array<i64: 18, 8>}, {pipeline_mode = #tpu.pipeline_mode<synchronous>, transform_indices = @transform_3, window_bounds = array<i64: 384, 128>}, {pipeline_mode = #tpu.pipeline_mode<synchronous>, transform_indices = @transform_4, window_bounds = array<i64: 1, 128>}, {pipeline_mode = #tpu.pipeline_mode<synchronous>, transform_indices = @transform_5, window_bounds = array<i64: 384, 128>}, {pipeline_mode = #tpu.pipeline_mode<synchronous>, transform_indices = @transform_6, window_bounds = array<i64: 1, 128>}, {transform_indices = @transform_7, window_bounds = array<i64: 2, 16, 128>}]} {
    %c0 = arith.constant 0 : index
    %c0_0 = arith.constant 0 : index
    %0 = vector.load %arg3[%c0, %c0_0] : memref<18x8xbf16, #tpu.memory_space<vmem>>, vector<18x8xbf16>
    %cst = arith.constant 0.000000e+00 : bf16
    %1 = vector.broadcast %cst : bf16 to vector<1x64xbf16>
    %cst_1 = arith.constant 0.000000e+00 : bf16
    %2 = vector.broadcast %cst_1 : bf16 to vector<1x128xbf16>
    %c0_2 = arith.constant 0 : index
    %c0_3 = arith.constant 0 : index
    %c0_4 = arith.constant 0 : index
    %3 = vector.load %arg2[%c0_2, %c0_3, %c0_4] : memref<2x8x64xbf16, #tpu.memory_space<vmem>>, vector<1x8x64xbf16>
    %4 = vector.shape_cast %3 : vector<1x8x64xbf16> to vector<8x64xbf16>
    %cst_5 = arith.constant dense<0.000000e+00> : vector<18x64xf32>
    %5 = tpu.matmul %0, %4, %cst_5 {dimension_numbers = #tpu.dot_dimension_numbers<[1], [0], [0], [1], [0, 0, 1, 1], [], []>} : vector<18x8xbf16>, vector<8x64xbf16>, vector<18x64xf32> -> vector<18x64xf32>
    %6 = arith.truncf %5 : vector<18x64xf32> to vector<18x64xbf16>
    %c0_6 = arith.constant 0 : index
    %c0_7 = arith.constant 0 : index
    %c0_8 = arith.constant 0 : index
    %7 = vector.load %arg1[%c0_6, %c0_7, %c0_8] : memref<2x16x64xbf16, #tpu.memory_space<vmem>>, vector<1x16x64xbf16>
    %8 = vector.shape_cast %7 : vector<1x16x64xbf16> to vector<16x64xbf16>
    %9 = tpu.concatenate %1, %8, %1 in 0 : vector<1x64xbf16>, vector<16x64xbf16>, vector<1x64xbf16> -> vector<18x64xbf16>
    %10 = vector.extract_strided_slice %9 {offsets = [0, 0], sizes = [16, 64], strides = [1, 1]} : vector<18x64xbf16> to vector<16x64xbf16>
    %11 = vector.extract_strided_slice %9 {offsets = [1, 0], sizes = [16, 64], strides = [1, 1]} : vector<18x64xbf16> to vector<16x64xbf16>
    %12 = vector.extract_strided_slice %9 {offsets = [2, 0], sizes = [16, 64], strides = [1, 1]} : vector<18x64xbf16> to vector<16x64xbf16>
    %13 = vector.extract_strided_slice %6 {offsets = [0, 0], sizes = [16, 64], strides = [1, 1]} : vector<18x64xbf16> to vector<16x64xbf16>
    %14 = vector.extract_strided_slice %6 {offsets = [1, 0], sizes = [16, 64], strides = [1, 1]} : vector<18x64xbf16> to vector<16x64xbf16>
    %15 = vector.extract_strided_slice %6 {offsets = [2, 0], sizes = [16, 64], strides = [1, 1]} : vector<18x64xbf16> to vector<16x64xbf16>
    %16 = tpu.concatenate %10, %11, %12, %13, %14, %15 in 1 : vector<16x64xbf16>, vector<16x64xbf16>, vector<16x64xbf16>, vector<16x64xbf16>, vector<16x64xbf16>, vector<16x64xbf16> -> vector<16x384xbf16>
    %c1 = arith.constant 1 : index
    %c0_9 = arith.constant 0 : index
    %c0_10 = arith.constant 0 : index
    %17 = vector.load %arg2[%c1, %c0_9, %c0_10] : memref<2x8x64xbf16, #tpu.memory_space<vmem>>, vector<1x8x64xbf16>
    %18 = vector.shape_cast %17 : vector<1x8x64xbf16> to vector<8x64xbf16>
    %cst_11 = arith.constant dense<0.000000e+00> : vector<18x64xf32>
    %19 = tpu.matmul %0, %18, %cst_11 {dimension_numbers = #tpu.dot_dimension_numbers<[1], [0], [0], [1], [0, 0, 1, 1], [], []>} : vector<18x8xbf16>, vector<8x64xbf16>, vector<18x64xf32> -> vector<18x64xf32>
    %20 = arith.truncf %19 : vector<18x64xf32> to vector<18x64xbf16>
    %c1_12 = arith.constant 1 : index
    %c0_13 = arith.constant 0 : index
    %c0_14 = arith.constant 0 : index
    %21 = vector.load %arg1[%c1_12, %c0_13, %c0_14] : memref<2x16x64xbf16, #tpu.memory_space<vmem>>, vector<1x16x64xbf16>
    %22 = vector.shape_cast %21 : vector<1x16x64xbf16> to vector<16x64xbf16>
    %23 = tpu.concatenate %1, %22, %1 in 0 : vector<1x64xbf16>, vector<16x64xbf16>, vector<1x64xbf16> -> vector<18x64xbf16>
    %24 = vector.extract_strided_slice %23 {offsets = [0, 0], sizes = [16, 64], strides = [1, 1]} : vector<18x64xbf16> to vector<16x64xbf16>
    %25 = vector.extract_strided_slice %23 {offsets = [1, 0], sizes = [16, 64], strides = [1, 1]} : vector<18x64xbf16> to vector<16x64xbf16>
    %26 = vector.extract_strided_slice %23 {offsets = [2, 0], sizes = [16, 64], strides = [1, 1]} : vector<18x64xbf16> to vector<16x64xbf16>
    %27 = vector.extract_strided_slice %20 {offsets = [0, 0], sizes = [16, 64], strides = [1, 1]} : vector<18x64xbf16> to vector<16x64xbf16>
    %28 = vector.extract_strided_slice %20 {offsets = [1, 0], sizes = [16, 64], strides = [1, 1]} : vector<18x64xbf16> to vector<16x64xbf16>
    %29 = vector.extract_strided_slice %20 {offsets = [2, 0], sizes = [16, 64], strides = [1, 1]} : vector<18x64xbf16> to vector<16x64xbf16>
    %30 = tpu.concatenate %24, %25, %26, %27, %28, %29 in 1 : vector<16x64xbf16>, vector<16x64xbf16>, vector<16x64xbf16>, vector<16x64xbf16>, vector<16x64xbf16>, vector<16x64xbf16> -> vector<16x384xbf16>
    %31 = tpu.concatenate %16, %30 in 0 : vector<16x384xbf16>, vector<16x384xbf16> -> vector<32x384xbf16>
    %c0_15 = arith.constant 0 : index
    %c0_16 = arith.constant 0 : index
    %32 = vector.load %arg4[%c0_15, %c0_16] : memref<384x128xbf16, #tpu.memory_space<vmem>>, vector<384x128xbf16>
    %cst_17 = arith.constant dense<0.000000e+00> : vector<32x128xf32>
    %33 = tpu.matmul %31, %32, %cst_17 {dimension_numbers = #tpu.dot_dimension_numbers<[1], [0], [0], [1], [0, 0, 1, 1], [], []>} : vector<32x384xbf16>, vector<384x128xbf16>, vector<32x128xf32> -> vector<32x128xf32>
    %c0_18 = arith.constant 0 : index
    %c0_19 = arith.constant 0 : index
    %34 = vector.load %arg5[%c0_18, %c0_19] : memref<1x128xf32, #tpu.memory_space<vmem>>, vector<1x128xf32>
    %35 = vector.broadcast %34 : vector<1x128xf32> to vector<32x128xf32>
    %36 = arith.addf %33, %35 : vector<32x128xf32>
    %cst_20 = arith.constant 0.000000e+00 : f32
    %37 = vector.broadcast %cst_20 : f32 to vector<32x128xf32>
    %38 = arith.maximumf %36, %37 : vector<32x128xf32>
    %39 = arith.truncf %38 : vector<32x128xf32> to vector<32x128xbf16>
    %40 = vector.extract_strided_slice %39 {offsets = [0, 0], sizes = [16, 128], strides = [1, 1]} : vector<32x128xbf16> to vector<16x128xbf16>
    %41 = tpu.concatenate %2, %40, %2 in 0 : vector<1x128xbf16>, vector<16x128xbf16>, vector<1x128xbf16> -> vector<18x128xbf16>
    %42 = vector.extract_strided_slice %41 {offsets = [0, 0], sizes = [16, 128], strides = [1, 1]} : vector<18x128xbf16> to vector<16x128xbf16>
    %43 = vector.extract_strided_slice %41 {offsets = [1, 0], sizes = [16, 128], strides = [1, 1]} : vector<18x128xbf16> to vector<16x128xbf16>
    %44 = vector.extract_strided_slice %41 {offsets = [2, 0], sizes = [16, 128], strides = [1, 1]} : vector<18x128xbf16> to vector<16x128xbf16>
    %45 = tpu.concatenate %42, %43, %44 in 1 : vector<16x128xbf16>, vector<16x128xbf16>, vector<16x128xbf16> -> vector<16x384xbf16>
    %46 = vector.extract_strided_slice %39 {offsets = [16, 0], sizes = [16, 128], strides = [1, 1]} : vector<32x128xbf16> to vector<16x128xbf16>
    %47 = tpu.concatenate %2, %46, %2 in 0 : vector<1x128xbf16>, vector<16x128xbf16>, vector<1x128xbf16> -> vector<18x128xbf16>
    %48 = vector.extract_strided_slice %47 {offsets = [0, 0], sizes = [16, 128], strides = [1, 1]} : vector<18x128xbf16> to vector<16x128xbf16>
    %49 = vector.extract_strided_slice %47 {offsets = [1, 0], sizes = [16, 128], strides = [1, 1]} : vector<18x128xbf16> to vector<16x128xbf16>
    %50 = vector.extract_strided_slice %47 {offsets = [2, 0], sizes = [16, 128], strides = [1, 1]} : vector<18x128xbf16> to vector<16x128xbf16>
    %51 = tpu.concatenate %48, %49, %50 in 1 : vector<16x128xbf16>, vector<16x128xbf16>, vector<16x128xbf16> -> vector<16x384xbf16>
    %52 = tpu.concatenate %45, %51 in 0 : vector<16x384xbf16>, vector<16x384xbf16> -> vector<32x384xbf16>
    %c0_21 = arith.constant 0 : index
    %c0_22 = arith.constant 0 : index
    %53 = vector.load %arg6[%c0_21, %c0_22] : memref<384x128xbf16, #tpu.memory_space<vmem>>, vector<384x128xbf16>
    %cst_23 = arith.constant dense<0.000000e+00> : vector<32x128xf32>
    %54 = tpu.matmul %52, %53, %cst_23 {dimension_numbers = #tpu.dot_dimension_numbers<[1], [0], [0], [1], [0, 0, 1, 1], [], []>} : vector<32x384xbf16>, vector<384x128xbf16>, vector<32x128xf32> -> vector<32x128xf32>
    %c0_24 = arith.constant 0 : index
    %c0_25 = arith.constant 0 : index
    %55 = vector.load %arg7[%c0_24, %c0_25] : memref<1x128xf32, #tpu.memory_space<vmem>>, vector<1x128xf32>
    %56 = vector.broadcast %55 : vector<1x128xf32> to vector<32x128xf32>
    %57 = arith.addf %54, %56 : vector<32x128xf32>
    %cst_26 = arith.constant 0.000000e+00 : f32
    %58 = vector.broadcast %cst_26 : f32 to vector<32x128xf32>
    %59 = arith.maximumf %57, %58 : vector<32x128xf32>
    %60 = vector.shape_cast %59 : vector<32x128xf32> to vector<2x16x128xf32>
    %61 = arith.truncf %60 : vector<2x16x128xf32> to vector<2x16x128xbf16>
    %c0_27 = arith.constant 0 : index
    %c0_28 = arith.constant 0 : index
    %c0_29 = arith.constant 0 : index
    %62 = vector.load %arg8[%c0_27, %c0_28, %c0_29] : memref<2x16x128xbf16, #tpu.memory_space<vmem>>, vector<2x16x128xbf16>
    tpu.vector_store %arg8[%c0_27, %c0_28, %c0_29], %61 {strides = array<i32>} : memref<2x16x128xbf16, #tpu.memory_space<vmem>>, vector<2x16x128xbf16>,
    return
  }
  func.func @transform_0(%arg0: i32) -> (i32, i32, i32) {
    %c0_i32 = arith.constant 0 : i32
    %c0_i32_0 = arith.constant 0 : i32
    %c0_i32_1 = arith.constant 0 : i32
    return %arg0, %c0_i32, %c0_i32_0 : i32, i32, i32
  }
  func.func @transform_1(%arg0: i32) -> (i32, i32, i32) {
    %c0_i32 = arith.constant 0 : i32
    %c0_i32_0 = arith.constant 0 : i32
    %c0_i32_1 = arith.constant 0 : i32
    return %arg0, %c0_i32, %c0_i32_0 : i32, i32, i32
  }
  func.func @transform_2(%arg0: i32) -> (i32, i32) {
    %c0_i32 = arith.constant 0 : i32
    %c0_i32_0 = arith.constant 0 : i32
    %c0_i32_1 = arith.constant 0 : i32
    return %c0_i32, %c0_i32_0 : i32, i32
  }
  func.func @transform_3(%arg0: i32) -> (i32, i32) {
    %c0_i32 = arith.constant 0 : i32
    %c0_i32_0 = arith.constant 0 : i32
    %c0_i32_1 = arith.constant 0 : i32
    return %c0_i32, %c0_i32_0 : i32, i32
  }
  func.func @transform_4(%arg0: i32) -> (i32, i32) {
    %c0_i32 = arith.constant 0 : i32
    %c0_i32_0 = arith.constant 0 : i32
    %c0_i32_1 = arith.constant 0 : i32
    return %c0_i32, %c0_i32_0 : i32, i32
  }
  func.func @transform_5(%arg0: i32) -> (i32, i32) {
    %c0_i32 = arith.constant 0 : i32
    %c0_i32_0 = arith.constant 0 : i32
    %c0_i32_1 = arith.constant 0 : i32
    return %c0_i32, %c0_i32_0 : i32, i32
  }
  func.func @transform_6(%arg0: i32) -> (i32, i32) {
    %c0_i32 = arith.constant 0 : i32
    %c0_i32_0 = arith.constant 0 : i32
    %c0_i32_1 = arith.constant 0 : i32
    return %c0_i32, %c0_i32_0 : i32, i32
  }
  func.func @transform_7(%arg0: i32) -> (i32, i32, i32) {
    %c0_i32 = arith.constant 0 : i32
    %c0_i32_0 = arith.constant 0 : i32
    %c0_i32_1 = arith.constant 0 : i32
    return %arg0, %c0_i32, %c0_i32_0 : i32, i32, i32
  }
}

</mosaic_0001>

<llo_original>
// kernel: unet_up_forward.1
$region0: #{unet_up_forward.1}
  #allocation0 [shape = 'u32[]', space=smem, size = 0x4, offset = 0x4, fixed_abs, tag = 'smem constant byte address 0x4 - core index']
  #allocation1 [shape = 'u32[144,128]{1,0:T(1,128)}', space=vmem, size = 0x12000, scoped, tag = 'internal scratch']
  %s0 = inlined_call_operand.vmem [shape: bf16[2,16,64], index: 0, kind: input, shape index: {}]
  %s1 = inlined_call_operand.vmem [shape: bf16[2,8,64], index: 1, kind: input, shape index: {}]
  %s2 = inlined_call_operand.vmem [shape: bf16[18,8], index: 2, kind: input, shape index: {}]
  %s3 = inlined_call_operand.vmem [shape: bf16[384,128], index: 3, kind: input, shape index: {}]
  %s4 = inlined_call_operand.vmem [shape: f32[1,128], index: 4, kind: input, shape index: {}]
  %s5 = inlined_call_operand.vmem [shape: bf16[384,128], index: 5, kind: input, shape index: {}]
  %s6 = inlined_call_operand.vmem [shape: f32[1,128], index: 6, kind: input, shape index: {}]
  %s7 = inlined_call_operand.vmem [shape: bf16[2,16,128], index: 7, kind: output, shape index: {}]
  %s8 = sld [smem:[#allocation0]]
  $region38: #{unet_up_forward.1} parent=0
    _
  %s10 = ssub.s32 1, %s8
  %s11 = scalar_select 0, %s10, %s8
  // Predicated region
  $region2: #{unet_up_forward.1} parent=0 // pred_check
    _
  $region3: #{unet_up_forward.1} parent=0 // pred_check_branch
    %13 = sbr.rel (0) target = $region5
  $region4: #{unet_up_forward.1} parent=0 // pred_region
    _
  $region5: #{unet_up_forward.1} parent=0 // pred_fallthru
    _
  // Predicated region
  $region6: #{unet_up_forward.1} parent=0 // pred_check
    _
  $region7: #{unet_up_forward.1} parent=0 // pred_check_branch
    %15 = sbr.rel (0) target = $region9
  $region8: #{unet_up_forward.1} parent=0 // pred_region
    _
  $region9: #{unet_up_forward.1} parent=0 // pred_fallthru
    _
  // Predicated region
  $region10: #{unet_up_forward.1} parent=0 // pred_check
    _
  $region11: #{unet_up_forward.1} parent=0 // pred_check_branch
    %17 = sbr.rel (0) target = $region13
  $region12: #{unet_up_forward.1} parent=0 // pred_region
    _
  $region13: #{unet_up_forward.1} parent=0 // pred_fallthru
    _
  // Predicated region
  $region14: #{unet_up_forward.1} parent=0 // pred_check
    _
  $region15: #{unet_up_forward.1} parent=0 // pred_check_branch
    %19 = sbr.rel (0) target = $region17
  $region16: #{unet_up_forward.1} parent=0 // pred_region
    _
  $region17: #{unet_up_forward.1} parent=0 // pred_fallthru
    _
  // Predicated region
  $region18: #{unet_up_forward.1} parent=0 // pred_check
    _
  $region19: #{unet_up_forward.1} parent=0 // pred_check_branch
    %21 = sbr.rel (0) target = $region21
  $region20: #{unet_up_forward.1} parent=0 // pred_region
    _
  $region21: #{unet_up_forward.1} parent=0 // pred_fallthru
    _
  // Predicated region
  $region22: #{unet_up_forward.1} parent=0 // pred_check
    _
  $region23: #{unet_up_forward.1} parent=0 // pred_check_branch
    %23 = sbr.rel (0) target = $region25
  $region24: #{unet_up_forward.1} parent=0 // pred_region
    _
  $region25: #{unet_up_forward.1} parent=0 // pred_fallthru
    _
  // Predicated region
  $region26: #{unet_up_forward.1} parent=0 // pred_check
    _
  $region27: #{unet_up_forward.1} parent=0 // pred_check_branch
    %25 = sbr.rel (0) target = $region29
  $region28: #{unet_up_forward.1} parent=0 // pred_region
    _
  $region29: #{unet_up_forward.1} parent=0 // pred_fallthru
    _
  %v27 = vld [vmem:[%s2] sm:$0xf]
  %v28 = vld [vmem:[%s2 + $0x4] sm:$0xf]
  %v29 = vld [vmem:[%s2 + $0x8] sm:$0x1]
  %v30 = vld [vmem:[%s1] sm:$0xf]
  %v34 = vunpack.c.l.b16 %v27
  %v35 = vunpack.c.l.b16 %v28
  %v36 = vunpack.c.l.b16 %v29
  %v37 = vpack.c.b16 %v35, %v34
  %v38 = vpack.c.b16 %v36, %v36
  %vm39 = vcmask 64512
  %v41 = vsel %vm39, %v37, 0
  %v44 = vsel %vm39, %v38, 0
  %vm46 = vcmask 1043456
  %v48 = vsel %vm46, %v30, 0
  %50 = vmatprep.subr.bf16.mxu0 0
  %51 = vmatpush1.bf16.msra.mxu0 %v48
  %52 = vmatprep.subr.bf16.mxu0 0
  %53 = vmatpush1.bf16.msra.mxu0 0
  %54 = vmatprep.subr.bf16.mxu0 0
  %55 = vmatpush1.bf16.msra.mxu0 0
  %56 = vmatprep.subr.bf16.mxu0 0
  %57 = vmatpush1.bf16.msra.mxu0 0
  %58 = vmatprep.subr.bf16.mxu0 0
  %59 = vmatpush1.bf16.msra.mxu0 0
  %60 = vmatprep.subr.bf16.mxu0 0
  %61 = vmatpush1.bf16.msra.mxu0 0
  %62 = vmatprep.subr.bf16.mxu0 0
  %63 = vmatpush1.bf16.msra.mxu0 0
  %64 = vmatprep.subr.bf16.mxu0 0
  %65 = vmatpush1.bf16.msra.mxu0 0
  %66 = vmatprep.subr.bf16.mxu0 0
  %67 = vmatpush1.bf16.msra.mxu0 0
  %68 = vmatprep.subr.bf16.mxu0 0
  %69 = vmatpush1.bf16.msra.mxu0 0
  %70 = vmatprep.subr.bf16.mxu0 0
  %71 = vmatpush1.bf16.msra.mxu0 0
  %72 = vmatprep.subr.bf16.mxu0 0
  %73 = vmatpush1.bf16.msra.mxu0 0
  %74 = vmatprep.subr.bf16.mxu0 0
  %75 = vmatpush1.bf16.msra.mxu0 0
  %76 = vmatprep.subr.bf16.mxu0 0
  %77 = vmatpush1.bf16.msra.mxu0 0
  %78 = vmatprep.subr.bf16.mxu0 0
  %79 = vmatpush1.bf16.msra.mxu0 0
  %80 = vmatprep.subr.bf16.mxu0 0
  %81 = vmatpush1.bf16.msra.mxu0 0
  %82 = vmatprep.mubr.bf16.mxu0 0
  %83 = vmatmul.mubr.bf16.gmra.mrb[0].mxu0 %v41
  %v84 = vpop.f32.mrb[0].mxu0
  %v85 = vadd.f32 0.0, %v84
  %v86 = vpop.f32.mrb[0].mxu0
  %v87 = vpop.f32.mrb[0].mxu0
  %v88 = vadd.f32 0.0, %v87
  %v89 = vpop.f32.mrb[0].mxu0
  %90 = vmatprep.mubr.bf16.mxu0 0
  %91 = vmatmul.mubr.bf16.gmra.mrb[0].mxu0 %v44
  %v92 = vpop.f32.mrb[0].mxu0
  %v93 = vadd.f32 0.0, %v92
  %v94 = vpop.f32.mrb[0].mxu0
  %v95 = vpop.f32.mrb[0].mxu0
  %v96 = vpop.f32.mrb[0].mxu0
  %97 = vdwg.mxu0
  %v98 = vpack.c.bf16 %v88, %v85
  %v99 = vpack.c.bf16 %v93, %v93
  %v100 = vld [vmem:[%s0] sm:$0xf]
  %v101 = vld [vmem:[%s0 + $0x4] sm:$0xf]
  %v104 = vunpack.c.l.b16 %v100
  %v105 = vunpack.c.l.b16 %v101
  %v106 = vpack.c.b16 %v105, %v104
  %v108 = vshrl.u32 %v106, 16
  %v110 = vrot.slane %v108, 7
  %v111 = vshll.u32 %v106, 16
  %v113 = vor.u32 %v110, %v111
  %vm116 = vcmask 1040384
  %vm117 = vsmask.f32 256
  %vm118 = vmand %vm116, %vm117
  %v119 = vsel %vm118, 0, %v113
  %v120 = vsel %vm118, %v110, 0
  %vm121 = vsmask.f32 7424
  %v123 = vshrl.u32 %v119, 16
  %v125 = vshll.u32 %v119, 16
  %v127 = vrot.slane %v125, 1
  %v128 = vor.u32 %v123, %v127
  %v130 = vshll.u32 %v120, 16
  %v132 = vrot.slane %v130, 1
  %v133 = vsel %vm121, %v128, %v132
  %134 = vrot.lane.b32.xlu0 %v133, 64
  %v135 = vpop.permute.xlu0 %134
  %vm138 = vcmask 1046528
  %v139 = vrot.slane %v119, 1
  %v140 = vrot.slane %v120, 1
  %v141 = vsel %vm138, %v139, %v140
  %143 = vrot.lane.b32.xlu0 %v98, 64
  %v144 = vpop.permute.xlu0 %143
  %v146 = vshrl.u32 %v98, 16
  %v148 = vshll.u32 %v98, 16
  %v150 = vrot.slane %v148, 1
  %v151 = vor.u32 %v146, %v150
  %v153 = vshll.u32 %v99, 16
  %v155 = vrot.slane %v153, 1
  %v156 = vsel %vm121, %v151, %v155
  %v158 = vrot.slane %v98, 1
  %v159 = vrot.slane %v99, 1
  %v160 = vsel %vm138, %v158, %v159
  %161 = vrot.lane.b32.xlu0 %v160, 64
  %v162 = vpop.permute.xlu0 %161
  %vm163 = vcmask 523264
  %v165 = vsel %vm163, %v119, %v135
  %v169 = vsel %vm163, %v141, %v144
  %v173 = vsel %vm163, %v156, %v162
  %s175 = scalar_lea.vmem %s1, 4
  %v176 = vld [vmem:[%s175] sm:$0xf]
  %v178 = vsel %vm46, %v176, 0
  %180 = vmatprep.subr.bf16.mxu0 0
  %181 = vmatpush1.bf16.msra.mxu0 %v178
  %182 = vmatprep.subr.bf16.mxu0 0
  %183 = vmatpush1.bf16.msra.mxu0 0
  %184 = vmatprep.subr.bf16.mxu0 0
  %185 = vmatpush1.bf16.msra.mxu0 0
  %186 = vmatprep.subr.bf16.mxu0 0
  %187 = vmatpush1.bf16.msra.mxu0 0
  %188 = vmatprep.subr.bf16.mxu0 0
  %189 = vmatpush1.bf16.msra.mxu0 0
  %190 = vmatprep.subr.bf16.mxu0 0
  %191 = vmatpush1.bf16.msra.mxu0 0
  %192 = vmatprep.subr.bf16.mxu0 0
  %193 = vmatpush1.bf16.msra.mxu0 0
  %194 = vmatprep.subr.bf16.mxu0 0
  %195 = vmatpush1.bf16.msra.mxu0 0
  %196 = vmatprep.subr.bf16.mxu0 0
  %197 = vmatpush1.bf16.msra.mxu0 0
  %198 = vmatprep.subr.bf16.mxu0 0
  %199 = vmatpush1.bf16.msra.mxu0 0
  %200 = vmatprep.subr.bf16.mxu0 0
  %201 = vmatpush1.bf16.msra.mxu0 0
  %202 = vmatprep.subr.bf16.mxu0 0
  %203 = vmatpush1.bf16.msra.mxu0 0
  %204 = vmatprep.subr.bf16.mxu0 0
  %205 = vmatpush1.bf16.msra.mxu0 0
  %206 = vmatprep.subr.bf16.mxu0 0
  %207 = vmatpush1.bf16.msra.mxu0 0
  %208 = vmatprep.subr.bf16.mxu0 0
  %209 = vmatpush1.bf16.msra.mxu0 0
  %210 = vmatprep.subr.bf16.mxu0 0
  %211 = vmatpush1.bf16.msra.mxu0 0
  %212 = vmatprep.mubr.bf16.mxu0 0
  %213 = vmatmul.mubr.bf16.gmra.mrb[0].mxu0 %v41
  %v214 = vpop.f32.mrb[0].mxu0
  %v215 = vadd.f32 0.0, %v214
  %v216 = vpop.f32.mrb[0].mxu0
  %v217 = vpop.f32.mrb[0].mxu0
  %v218 = vadd.f32 0.0, %v217
  %v219 = vpop.f32.mrb[0].mxu0
  %220 = vmatprep.mubr.bf16.mxu0 0
  %221 = vmatmul.mubr.bf16.gmra.mrb[0].mxu0 %v44
  %v222 = vpop.f32.mrb[0].mxu0
  %v223 = vadd.f32 0.0, %v222
  %v224 = vpop.f32.mrb[0].mxu0
  %v225 = vpop.f32.mrb[0].mxu0
  %v226 = vpop.f32.mrb[0].mxu0
  %227 = vdwg.mxu0
  %v228 = vpack.c.bf16 %v218, %v215
  %v229 = vpack.c.bf16 %v223, %v223
  %s230 = scalar_lea.vmem %s0, 8
  %v231 = vld [vmem:[%s230] sm:$0xf]
  %v232 = vld [vmem:[%s230 + $0x4] sm:$0xf]
  %v235 = vunpack.c.l.b16 %v231
  %v236 = vunpack.c.l.b16 %v232
  %v237 = vpack.c.b16 %v236, %v235
  %v239 = vshrl.u32 %v237, 16
  %v241 = vrot.slane %v239, 7
  %v242 = vshll.u32 %v237, 16
  %v244 = vor.u32 %v241, %v242
  %v247 = vsel %vm118, 0, %v244
  %v248 = vsel %vm118, %v241, 0
  %v250 = vshrl.u32 %v247, 16
  %v252 = vshll.u32 %v247, 16
  %v254 = vrot.slane %v252, 1
  %v255 = vor.u32 %v250, %v254
  %v257 = vshll.u32 %v248, 16
  %v259 = vrot.slane %v257, 1
  %v260 = vsel %vm121, %v255, %v259
  %261 = vrot.lane.b32.xlu0 %v260, 64
  %v262 = vpop.permute.xlu0 %261
  %v265 = vrot.slane %v247, 1
  %v266 = vrot.slane %v248, 1
  %v267 = vsel %vm138, %v265, %v266
  %269 = vrot.lane.b32.xlu0 %v228, 64
  %v270 = vpop.permute.xlu0 %269
  %v272 = vshrl.u32 %v228, 16
  %v274 = vshll.u32 %v228, 16
  %v276 = vrot.slane %v274, 1
  %v277 = vor.u32 %v272, %v276
  %v279 = vshll.u32 %v229, 16
  %v281 = vrot.slane %v279, 1
  %v282 = vsel %vm121, %v277, %v281
  %v284 = vrot.slane %v228, 1
  %v285 = vrot.slane %v229, 1
  %v286 = vsel %vm138, %v284, %v285
  %287 = vrot.lane.b32.xlu0 %v286, 64
  %v288 = vpop.permute.xlu0 %287
  %v290 = vsel %vm163, %v247, %v262
  %v294 = vsel %vm163, %v267, %v270
  %v298 = vsel %vm163, %v282, %v288
  %v300 = vld [vmem:[%s3] sm:$0xf]
  %v301 = vld [vmem:[%s3 + $0x4] sm:$0xf]
  %v302 = vld [vmem:[%s3 + $0x8] sm:$0xf]
  %v303 = vld [vmem:[%s3 + $0xc] sm:$0xf]
  %v304 = vld [vmem:[%s3 + $0x10] sm:$0xf]
  %v305 = vld [vmem:[%s3 + $0x14] sm:$0xf]
  %v306 = vld [vmem:[%s3 + $0x18] sm:$0xf]
  %v307 = vld [vmem:[%s3 + $0x1c] sm:$0xf]
  %v308 = vld [vmem:[%s3 + $0x20] sm:$0xf]
  %v309 = vld [vmem:[%s3 + $0x24] sm:$0xf]
  %v310 = vld [vmem:[%s3 + $0x28] sm:$0xf]
  %v311 = vld [vmem:[%s3 + $0x2c] sm:$0xf]
  %v312 = vld [vmem:[%s3 + $0x30] sm:$0xf]
  %v313 = vld [vmem:[%s3 + $0x34] sm:$0xf]
  %v314 = vld [vmem:[%s3 + $0x38] sm:$0xf]
  %v315 = vld [vmem:[%s3 + $0x3c] sm:$0xf]
  %v316 = vld [vmem:[%s3 + $0x40] sm:$0xf]
  %v317 = vld [vmem:[%s3 + $0x44] sm:$0xf]
  %v318 = vld [vmem:[%s3 + $0x48] sm:$0xf]
  %v319 = vld [vmem:[%s3 + $0x4c] sm:$0xf]
  %v320 = vld [vmem:[%s3 + $0x50] sm:$0xf]
  %v321 = vld [vmem:[%s3 + $0x54] sm:$0xf]
  %v322 = vld [vmem:[%s3 + $0x58] sm:$0xf]
  %v323 = vld [vmem:[%s3 + $0x5c] sm:$0xf]
  %v324 = vld [vmem:[%s3 + $0x60] sm:$0xf]
  %v325 = vld [vmem:[%s3 + $0x64] sm:$0xf]
  %v326 = vld [vmem:[%s3 + $0x68] sm:$0xf]
  %v327 = vld [vmem:[%s3 + $0x6c] sm:$0xf]
  %v328 = vld [vmem:[%s3 + $0x70] sm:$0xf]
  %v329 = vld [vmem:[%s3 + $0x74] sm:$0xf]
  %v330 = vld [vmem:[%s3 + $0x78] sm:$0xf]
  %v331 = vld [vmem:[%s3 + $0x7c] sm:$0xf]
  %v332 = vld [vmem:[%s3 + $0x80] sm:$0xf]
  %v333 = vld [vmem:[%s3 + $0x84] sm:$0xf]
  %v334 = vld [vmem:[%s3 + $0x88] sm:$0xf]
  %v335 = vld [vmem:[%s3 + $0x8c] sm:$0xf]
  %v336 = vld [vmem:[%s3 + $0x90] sm:$0xf]
  %v337 = vld [vmem:[%s3 + $0x94] sm:$0xf]
  %v338 = vld [vmem:[%s3 + $0x98] sm:$0xf]
  %v339 = vld [vmem:[%s3 + $0x9c] sm:$0xf]
  %v340 = vld [vmem:[%s3 + $0xa0] sm:$0xf]
  %v341 = vld [vmem:[%s3 + $0xa4] sm:$0xf]
  %v342 = vld [vmem:[%s3 + $0xa8] sm:$0xf]
  %v343 = vld [vmem:[%s3 + $0xac] sm:$0xf]
  %v344 = vld [vmem:[%s3 + $0xb0] sm:$0xf]
  %v345 = vld [vmem:[%s3 + $0xb4] sm:$0xf]
  %v346 = vld [vmem:[%s3 + $0xb8] sm:$0xf]
  %v347 = vld [vmem:[%s3 + $0xbc] sm:$0xf]
  %v348 = vld [vmem:[%s4] sm:$0x1]
  %v350 = vlaneseq
  %v351 = vshrl.u32 %v350, 7
  %v352 = vsub.s32 0, %v351
  %v353 = vrot.slane %v348, %v352
  %v403 = vunpack.c.l.b16 %v300
  %v404 = vunpack.c.l.b16 %v301
  %v405 = vunpack.c.l.b16 %v302
  %v406 = vunpack.c.l.b16 %v303
  %v407 = vunpack.c.l.b16 %v304
  %v408 = vunpack.c.l.b16 %v305
  %v409 = vunpack.c.l.b16 %v306
  %v410 = vunpack.c.l.b16 %v307
  %v411 = vunpack.c.l.b16 %v308
  %v412 = vunpack.c.l.b16 %v309
  %v413 = vunpack.c.l.b16 %v310
  %v414 = vunpack.c.l.b16 %v311
  %v415 = vunpack.c.l.b16 %v312
  %v416 = vunpack.c.l.b16 %v313
  %v417 = vunpack.c.l.b16 %v314
  %v418 = vunpack.c.l.b16 %v315
  %v419 = vunpack.c.l.b16 %v316
  %v420 = vunpack.c.l.b16 %v317
  %v421 = vunpack.c.l.b16 %v318
  %v422 = vunpack.c.l.b16 %v319
  %v423 = vunpack.c.l.b16 %v320
  %v424 = vunpack.c.l.b16 %v321
  %v425 = vunpack.c.l.b16 %v322
  %v426 = vunpack.c.l.b16 %v323
  %v427 = vunpack.c.l.b16 %v324
  %v428 = vunpack.c.l.b16 %v325
  %v429 = vunpack.c.l.b16 %v326
  %v430 = vunpack.c.l.b16 %v327
  %v431 = vunpack.c.l.b16 %v328
  %v432 = vunpack.c.l.b16 %v329
  %v433 = vunpack.c.l.b16 %v330
  %v434 = vunpack.c.l.b16 %v331
  %v435 = vunpack.c.l.b16 %v332
  %v436 = vunpack.c.l.b16 %v333
  %v437 = vunpack.c.l.b16 %v334
  %v438 = vunpack.c.l.b16 %v335
  %v439 = vunpack.c.l.b16 %v336
  %v440 = vunpack.c.l.b16 %v337
  %v441 = vunpack.c.l.b16 %v338
  %v442 = vunpack.c.l.b16 %v339
  %v443 = vunpack.c.l.b16 %v340
  %v444 = vunpack.c.l.b16 %v341
  %v445 = vunpack.c.l.b16 %v342
  %v446 = vunpack.c.l.b16 %v343
  %v447 = vunpack.c.l.b16 %v344
  %v448 = vunpack.c.l.b16 %v345
  %v449 = vunpack.c.l.b16 %v346
  %v450 = vunpack.c.l.b16 %v347
  %v451 = vpack.c.b16 %v404, %v403
  %v452 = vpack.c.b16 %v406, %v405
  %v453 = vpack.c.b16 %v408, %v407
  %v454 = vpack.c.b16 %v410, %v409
  %v455 = vpack.c.b16 %v412, %v411
  %v456 = vpack.c.b16 %v414, %v413
  %v457 = vpack.c.b16 %v416, %v415
  %v458 = vpack.c.b16 %v418, %v417
  %v459 = vpack.c.b16 %v420, %v419
  %v460 = vpack.c.b16 %v422, %v421
  %v461 = vpack.c.b16 %v424, %v423
  %v462 = vpack.c.b16 %v426, %v425
  %v463 = vpack.c.b16 %v428, %v427
  %v464 = vpack.c.b16 %v430, %v429
  %v465 = vpack.c.b16 %v432, %v431
  %v466 = vpack.c.b16 %v434, %v433
  %v467 = vpack.c.b16 %v436, %v435
  %v468 = vpack.c.b16 %v438, %v437
  %v469 = vpack.c.b16 %v440, %v439
  %v470 = vpack.c.b16 %v442, %v441
  %v471 = vpack.c.b16 %v444, %v443
  %v472 = vpack.c.b16 %v446, %v445
  %v473 = vpack.c.b16 %v448, %v447
  %v474 = vpack.c.b16 %v450, %v449
  %499 = vmatprep.subr.bf16.mxu0 0
  %500 = vmatpush1.bf16.msra.mxu0 %v451
  %501 = vmatprep.subr.bf16.mxu0 0
  %502 = vmatpush1.bf16.msra.mxu0 %v452
  %503 = vmatprep.subr.bf16.mxu0 0
  %504 = vmatpush1.bf16.msra.mxu0 %v453
  %505 = vmatprep.subr.bf16.mxu0 0
  %506 = vmatpush1.bf16.msra.mxu0 %v454
  %507 = vmatprep.subr.bf16.mxu0 0
  %508 = vmatpush1.bf16.msra.mxu0 %v455
  %509 = vmatprep.subr.bf16.mxu0 0
  %510 = vmatpush1.bf16.msra.mxu0 %v456
  %511 = vmatprep.subr.bf16.mxu0 0
  %512 = vmatpush1.bf16.msra.mxu0 %v457
  %513 = vmatprep.subr.bf16.mxu0 0
  %514 = vmatpush1.bf16.msra.mxu0 %v458
  %515 = vmatprep.subr.bf16.mxu0 0
  %516 = vmatpush1.bf16.msra.mxu0 %v459
  %517 = vmatprep.subr.bf16.mxu0 0
  %518 = vmatpush1.bf16.msra.mxu0 %v460
  %519 = vmatprep.subr.bf16.mxu0 0
  %520 = vmatpush1.bf16.msra.mxu0 %v461
  %521 = vmatprep.subr.bf16.mxu0 0
  %522 = vmatpush1.bf16.msra.mxu0 %v462
  %523 = vmatprep.subr.bf16.mxu0 0
  %524 = vmatpush1.bf16.msra.mxu0 %v463
  %525 = vmatprep.subr.bf16.mxu0 0
  %526 = vmatpush1.bf16.msra.mxu0 %v464
  %527 = vmatprep.subr.bf16.mxu0 0
  %528 = vmatpush1.bf16.msra.mxu0 %v465
  %529 = vmatprep.subr.bf16.mxu0 0
  %530 = vmatpush1.bf16.msra.mxu0 %v466
  %531 = vmatprep.mubr.bf16.mxu0 %v169
  %532 = vmatmul.mubr.bf16.gmra.mrb[0].mxu0 %v165
  %v533 = vpop.f32.mrb[0].mxu0
  %v534 = vadd.f32 %v353, %v533
  %v535 = vpop.f32.mrb[0].mxu0
  %v536 = vpop.f32.mrb[0].mxu0
  %v537 = vadd.f32 %v353, %v536
  %v538 = vpop.f32.mrb[0].mxu0
  %539 = vmatprep.mubr.bf16.mxu0 %v294
  %540 = vmatmul.mubr.bf16.gmra.mrb[0].mxu0 %v290
  %v541 = vpop.f32.mrb[0].mxu0
  %v542 = vadd.f32 %v353, %v541
  %v543 = vpop.f32.mrb[0].mxu0
  %v544 = vpop.f32.mrb[0].mxu0
  %v545 = vadd.f32 %v353, %v544
  %v546 = vpop.f32.mrb[0].mxu0
  %547 = vdwg.mxu0
  %548 = vmatprep.subr.bf16.mxu0 0
  %549 = vmatpush1.bf16.msra.mxu0 %v467
  %550 = vmatprep.subr.bf16.mxu0 0
  %551 = vmatpush1.bf16.msra.mxu0 %v468
  %552 = vmatprep.subr.bf16.mxu0 0
  %553 = vmatpush1.bf16.msra.mxu0 %v469
  %554 = vmatprep.subr.bf16.mxu0 0
  %555 = vmatpush1.bf16.msra.mxu0 %v470
  %556 = vmatprep.subr.bf16.mxu0 0
  %557 = vmatpush1.bf16.msra.mxu0 %v471
  %558 = vmatprep.subr.bf16.mxu0 0
  %559 = vmatpush1.bf16.msra.mxu0 %v472
  %560 = vmatprep.subr.bf16.mxu0 0
  %561 = vmatpush1.bf16.msra.mxu0 %v473
  %562 = vmatprep.subr.bf16.mxu0 0
  %563 = vmatpush1.bf16.msra.mxu0 %v474
  %564 = vmatprep.subr.bf16.mxu0 0
  %565 = vmatpush1.bf16.msra.mxu0 0
  %566 = vmatprep.subr.bf16.mxu0 0
  %567 = vmatpush1.bf16.msra.mxu0 0
  %568 = vmatprep.subr.bf16.mxu0 0
  %569 = vmatpush1.bf16.msra.mxu0 0
  %570 = vmatprep.subr.bf16.mxu0 0
  %571 = vmatpush1.bf16.msra.mxu0 0
  %572 = vmatprep.subr.bf16.mxu0 0
  %573 = vmatpush1.bf16.msra.mxu0 0
  %574 = vmatprep.subr.bf16.mxu0 0
  %575 = vmatpush1.bf16.msra.mxu0 0
  %576 = vmatprep.subr.bf16.mxu0 0
  %577 = vmatpush1.bf16.msra.mxu0 0
  %578 = vmatprep.subr.bf16.mxu0 0
  %579 = vmatpush1.bf16.msra.mxu0 0
  %580 = vmatprep.mubr.bf16.mxu0 0
  %581 = vmatmul.mubr.bf16.gmra.mrb[0].mxu0 %v173
  %v582 = vpop.f32.mrb[0].mxu0
  %v583 = vadd.f32 %v534, %v582
  %v584 = vpop.f32.mrb[0].mxu0
  %v585 = vpop.f32.mrb[0].mxu0
  %v586 = vadd.f32 %v537, %v585
  %v587 = vpop.f32.mrb[0].mxu0
  %588 = vmatprep.mubr.bf16.mxu0 0
  %589 = vmatmul.mubr.bf16.gmra.mrb[0].mxu0 %v298
  %v590 = vpop.f32.mrb[0].mxu0
  %v591 = vadd.f32 %v542, %v590
  %v592 = vpop.f32.mrb[0].mxu0
  %v593 = vpop.f32.mrb[0].mxu0
  %v594 = vadd.f32 %v545, %v593
  %v595 = vpop.f32.mrb[0].mxu0
  %596 = vdwg.mxu0
  %v597 = vmax.f32 %v583, 0.0
  %v598 = vmax.f32 %v586, 0.0
  %v599 = vmax.f32 %v591, 0.0
  %v600 = vmax.f32 %v594, 0.0
  %v601 = vpack.c.bf16 %v598, %v597
  %v602 = vpack.c.bf16 %v600, %v599
  %v604 = vshrl.u32 %v601, 16
  %v606 = vrot.slane %v604, 7
  %v607 = vshll.u32 %v601, 16
  %v609 = vor.u32 %v606, %v607
  %v612 = vsel %vm118, 0, %v609
  %v613 = vsel %vm118, %v606, 0
  %v615 = vshrl.u32 %v612, 16
  %v617 = vshll.u32 %v612, 16
  %v619 = vrot.slane %v617, 1
  %v620 = vor.u32 %v615, %v619
  %v622 = vshll.u32 %v613, 16
  %v624 = vrot.slane %v622, 1
  %v625 = vsel %vm121, %v620, %v624
  %v629 = vrot.slane %v612, 1
  %v630 = vrot.slane %v613, 1
  %v631 = vsel %vm138, %v629, %v630
  %v634 = vshrl.u32 %v602, 16
  %v636 = vrot.slane %v634, 7
  %v637 = vshll.u32 %v602, 16
  %v639 = vor.u32 %v636, %v637
  %v642 = vsel %vm118, 0, %v639
  %v643 = vsel %vm118, %v636, 0
  %v645 = vshrl.u32 %v642, 16
  %v647 = vshll.u32 %v642, 16
  %v649 = vrot.slane %v647, 1
  %v650 = vor.u32 %v645, %v649
  %v652 = vshll.u32 %v643, 16
  %v654 = vrot.slane %v652, 1
  %v655 = vsel %vm121, %v650, %v654
  %v659 = vrot.slane %v642, 1
  %v660 = vrot.slane %v643, 1
  %v661 = vsel %vm138, %v659, %v660
  %v663 = vld [vmem:[%s5] sm:$0xf]
  %v664 = vld [vmem:[%s5 + $0x4] sm:$0xf]
  %v665 = vld [vmem:[%s5 + $0x8] sm:$0xf]
  %v666 = vld [vmem:[%s5 + $0xc] sm:$0xf]
  %v667 = vld [vmem:[%s5 + $0x10] sm:$0xf]
  %v668 = vld [vmem:[%s5 + $0x14] sm:$0xf]
  %v669 = vld [vmem:[%s5 + $0x18] sm:$0xf]
  %v670 = vld [vmem:[%s5 + $0x1c] sm:$0xf]
  %v671 = vld [vmem:[%s5 + $0x20] sm:$0xf]
  %v672 = vld [vmem:[%s5 + $0x24] sm:$0xf]
  %v673 = vld [vmem:[%s5 + $0x28] sm:$0xf]
  %v674 = vld [vmem:[%s5 + $0x2c] sm:$0xf]
  %v675 = vld [vmem:[%s5 + $0x30] sm:$0xf]
  %v676 = vld [vmem:[%s5 + $0x34] sm:$0xf]
  %v677 = vld [vmem:[%s5 + $0x38] sm:$0xf]
  %v678 = vld [vmem:[%s5 + $0x3c] sm:$0xf]
  %v679 = vld [vmem:[%s5 + $0x40] sm:$0xf]
  %v680 = vld [vmem:[%s5 + $0x44] sm:$0xf]
  %v681 = vld [vmem:[%s5 + $0x48] sm:$0xf]
  %v682 = vld [vmem:[%s5 + $0x4c] sm:$0xf]
  %v683 = vld [vmem:[%s5 + $0x50] sm:$0xf]
  %v684 = vld [vmem:[%s5 + $0x54] sm:$0xf]
  %v685 = vld [vmem:[%s5 + $0x58] sm:$0xf]
  %v686 = vld [vmem:[%s5 + $0x5c] sm:$0xf]
  %v687 = vld [vmem:[%s5 + $0x60] sm:$0xf]
  %v688 = vld [vmem:[%s5 + $0x64] sm:$0xf]
  %v689 = vld [vmem:[%s5 + $0x68] sm:$0xf]
  %v690 = vld [vmem:[%s5 + $0x6c] sm:$0xf]
  %v691 = vld [vmem:[%s5 + $0x70] sm:$0xf]
  %v692 = vld [vmem:[%s5 + $0x74] sm:$0xf]
  %v693 = vld [vmem:[%s5 + $0x78] sm:$0xf]
  %v694 = vld [vmem:[%s5 + $0x7c] sm:$0xf]
  %v695 = vld [vmem:[%s5 + $0x80] sm:$0xf]
  %v696 = vld [vmem:[%s5 + $0x84] sm:$0xf]
  %v697 = vld [vmem:[%s5 + $0x88] sm:$0xf]
  %v698 = vld [vmem:[%s5 + $0x8c] sm:$0xf]
  %v699 = vld [vmem:[%s5 + $0x90] sm:$0xf]
  %v700 = vld [vmem:[%s5 + $0x94] sm:$0xf]
  %v701 = vld [vmem:[%s5 + $0x98] sm:$0xf]
  %v702 = vld [vmem:[%s5 + $0x9c] sm:$0xf]
  %v703 = vld [vmem:[%s5 + $0xa0] sm:$0xf]
  %v704 = vld [vmem:[%s5 + $0xa4] sm:$0xf]
  %v705 = vld [vmem:[%s5 + $0xa8] sm:$0xf]
  %v706 = vld [vmem:[%s5 + $0xac] sm:$0xf]
  %v707 = vld [vmem:[%s5 + $0xb0] sm:$0xf]
  %v708 = vld [vmem:[%s5 + $0xb4] sm:$0xf]
  %v709 = vld [vmem:[%s5 + $0xb8] sm:$0xf]
  %v710 = vld [vmem:[%s5 + $0xbc] sm:$0xf]
  %v711 = vld [vmem:[%s6] sm:$0x1]
  %v713 = vlaneseq
  %v714 = vshrl.u32 %v713, 7
  %v715 = vsub.s32 0, %v714
  %v716 = vrot.slane %v711, %v715
  %v766 = vunpack.c.l.b16 %v663
  %v767 = vunpack.c.l.b16 %v664
  %v768 = vunpack.c.l.b16 %v665
  %v769 = vunpack.c.l.b16 %v666
  %v770 = vunpack.c.l.b16 %v667
  %v771 = vunpack.c.l.b16 %v668
  %v772 = vunpack.c.l.b16 %v669
  %v773 = vunpack.c.l.b16 %v670
  %v774 = vunpack.c.l.b16 %v671
  %v775 = vunpack.c.l.b16 %v672
  %v776 = vunpack.c.l.b16 %v673
  %v777 = vunpack.c.l.b16 %v674
  %v778 = vunpack.c.l.b16 %v675
  %v779 = vunpack.c.l.b16 %v676
  %v780 = vunpack.c.l.b16 %v677
  %v781 = vunpack.c.l.b16 %v678
  %v782 = vunpack.c.l.b16 %v679
  %v783 = vunpack.c.l.b16 %v680
  %v784 = vunpack.c.l.b16 %v681
  %v785 = vunpack.c.l.b16 %v682
  %v786 = vunpack.c.l.b16 %v683
  %v787 = vunpack.c.l.b16 %v684
  %v788 = vunpack.c.l.b16 %v685
  %v789 = vunpack.c.l.b16 %v686
  %v790 = vunpack.c.l.b16 %v687
  %v791 = vunpack.c.l.b16 %v688
  %v792 = vunpack.c.l.b16 %v689
  %v793 = vunpack.c.l.b16 %v690
  %v794 = vunpack.c.l.b16 %v691
  %v795 = vunpack.c.l.b16 %v692
  %v796 = vunpack.c.l.b16 %v693
  %v797 = vunpack.c.l.b16 %v694
  %v798 = vunpack.c.l.b16 %v695
  %v799 = vunpack.c.l.b16 %v696
  %v800 = vunpack.c.l.b16 %v697
  %v801 = vunpack.c.l.b16 %v698
  %v802 = vunpack.c.l.b16 %v699
  %v803 = vunpack.c.l.b16 %v700
  %v804 = vunpack.c.l.b16 %v701
  %v805 = vunpack.c.l.b16 %v702
  %v806 = vunpack.c.l.b16 %v703
  %v807 = vunpack.c.l.b16 %v704
  %v808 = vunpack.c.l.b16 %v705
  %v809 = vunpack.c.l.b16 %v706
  %v810 = vunpack.c.l.b16 %v707
  %v811 = vunpack.c.l.b16 %v708
  %v812 = vunpack.c.l.b16 %v709
  %v813 = vunpack.c.l.b16 %v710
  %v814 = vpack.c.b16 %v767, %v766
  %v815 = vpack.c.b16 %v769, %v768
  %v816 = vpack.c.b16 %v771, %v770
  %v817 = vpack.c.b16 %v773, %v772
  %v818 = vpack.c.b16 %v775, %v774
  %v819 = vpack.c.b16 %v777, %v776
  %v820 = vpack.c.b16 %v779, %v778
  %v821 = vpack.c.b16 %v781, %v780
  %v822 = vpack.c.b16 %v783, %v782
  %v823 = vpack.c.b16 %v785, %v784
  %v824 = vpack.c.b16 %v787, %v786
  %v825 = vpack.c.b16 %v789, %v788
  %v826 = vpack.c.b16 %v791, %v790
  %v827 = vpack.c.b16 %v793, %v792
  %v828 = vpack.c.b16 %v795, %v794
  %v829 = vpack.c.b16 %v797, %v796
  %v830 = vpack.c.b16 %v799, %v798
  %v831 = vpack.c.b16 %v801, %v800
  %v832 = vpack.c.b16 %v803, %v802
  %v833 = vpack.c.b16 %v805, %v804
  %v834 = vpack.c.b16 %v807, %v806
  %v835 = vpack.c.b16 %v809, %v808
  %v836 = vpack.c.b16 %v811, %v810
  %v837 = vpack.c.b16 %v813, %v812
  %862 = vmatprep.subr.bf16.mxu0 0
  %863 = vmatpush1.bf16.msra.mxu0 %v814
  %864 = vmatprep.subr.bf16.mxu0 0
  %865 = vmatpush1.bf16.msra.mxu0 %v815
  %866 = vmatprep.subr.bf16.mxu0 0
  %867 = vmatpush1.bf16.msra.mxu0 %v816
  %868 = vmatprep.subr.bf16.mxu0 0
  %869 = vmatpush1.bf16.msra.mxu0 %v817
  %870 = vmatprep.subr.bf16.mxu0 0
  %871 = vmatpush1.bf16.msra.mxu0 %v818
  %872 = vmatprep.subr.bf16.mxu0 0
  %873 = vmatpush1.bf16.msra.mxu0 %v819
  %874 = vmatprep.subr.bf16.mxu0 0
  %875 = vmatpush1.bf16.msra.mxu0 %v820
  %876 = vmatprep.subr.bf16.mxu0 0
  %877 = vmatpush1.bf16.msra.mxu0 %v821
  %878 = vmatprep.subr.bf16.mxu0 0
  %879 = vmatpush1.bf16.msra.mxu0 %v822
  %880 = vmatprep.subr.bf16.mxu0 0
  %881 = vmatpush1.bf16.msra.mxu0 %v823
  %882 = vmatprep.subr.bf16.mxu0 0
  %883 = vmatpush1.bf16.msra.mxu0 %v824
  %884 = vmatprep.subr.bf16.mxu0 0
  %885 = vmatpush1.bf16.msra.mxu0 %v825
  %886 = vmatprep.subr.bf16.mxu0 0
  %887 = vmatpush1.bf16.msra.mxu0 %v826
  %888 = vmatprep.subr.bf16.mxu0 0
  %889 = vmatpush1.bf16.msra.mxu0 %v827
  %890 = vmatprep.subr.bf16.mxu0 0
  %891 = vmatpush1.bf16.msra.mxu0 %v828
  %892 = vmatprep.subr.bf16.mxu0 0
  %893 = vmatpush1.bf16.msra.mxu0 %v829
  %894 = vmatprep.mubr.bf16.mxu0 %v625
  %895 = vmatmul.mubr.bf16.gmra.mrb[0].mxu0 %v612
  %v896 = vpop.f32.mrb[0].mxu0
  %v897 = vadd.f32 %v716, %v896
  %v898 = vpop.f32.mrb[0].mxu0
  %v899 = vpop.f32.mrb[0].mxu0
  %v900 = vadd.f32 %v716, %v899
  %v901 = vpop.f32.mrb[0].mxu0
  %902 = vmatprep.mubr.bf16.mxu0 %v655
  %903 = vmatmul.mubr.bf16.gmra.mrb[0].mxu0 %v642
  %v904 = vpop.f32.mrb[0].mxu0
  %v905 = vadd.f32 %v716, %v904
  %v906 = vpop.f32.mrb[0].mxu0
  %v907 = vpop.f32.mrb[0].mxu0
  %v908 = vadd.f32 %v716, %v907
  %v909 = vpop.f32.mrb[0].mxu0
  %910 = vdwg.mxu0
  %911 = vmatprep.subr.bf16.mxu0 0
  %912 = vmatpush1.bf16.msra.mxu0 %v830
  %913 = vmatprep.subr.bf16.mxu0 0
  %914 = vmatpush1.bf16.msra.mxu0 %v831
  %915 = vmatprep.subr.bf16.mxu0 0
  %916 = vmatpush1.bf16.msra.mxu0 %v832
  %917 = vmatprep.subr.bf16.mxu0 0
  %918 = vmatpush1.bf16.msra.mxu0 %v833
  %919 = vmatprep.subr.bf16.mxu0 0
  %920 = vmatpush1.bf16.msra.mxu0 %v834
  %921 = vmatprep.subr.bf16.mxu0 0
  %922 = vmatpush1.bf16.msra.mxu0 %v835
  %923 = vmatprep.subr.bf16.mxu0 0
  %924 = vmatpush1.bf16.msra.mxu0 %v836
  %925 = vmatprep.subr.bf16.mxu0 0
  %926 = vmatpush1.bf16.msra.mxu0 %v837
  %927 = vmatprep.subr.bf16.mxu0 0
  %928 = vmatpush1.bf16.msra.mxu0 0
  %929 = vmatprep.subr.bf16.mxu0 0
  %930 = vmatpush1.bf16.msra.mxu0 0
  %931 = vmatprep.subr.bf16.mxu0 0
  %932 = vmatpush1.bf16.msra.mxu0 0
  %933 = vmatprep.subr.bf16.mxu0 0
  %934 = vmatpush1.bf16.msra.mxu0 0
  %935 = vmatprep.subr.bf16.mxu0 0
  %936 = vmatpush1.bf16.msra.mxu0 0
  %937 = vmatprep.subr.bf16.mxu0 0
  %938 = vmatpush1.bf16.msra.mxu0 0
  %939 = vmatprep.subr.bf16.mxu0 0
  %940 = vmatpush1.bf16.msra.mxu0 0
  %941 = vmatprep.subr.bf16.mxu0 0
  %942 = vmatpush1.bf16.msra.mxu0 0
  %943 = vmatprep.mubr.bf16.mxu0 0
  %944 = vmatmul.mubr.bf16.gmra.mrb[0].mxu0 %v631
  %v945 = vpop.f32.mrb[0].mxu0
  %v946 = vadd.f32 %v897, %v945
  %v947 = vpop.f32.mrb[0].mxu0
  %v948 = vpop.f32.mrb[0].mxu0
  %v949 = vadd.f32 %v900, %v948
  %v950 = vpop.f32.mrb[0].mxu0
  %951 = vmatprep.mubr.bf16.mxu0 0
  %952 = vmatmul.mubr.bf16.gmra.mrb[0].mxu0 %v661
  %v953 = vpop.f32.mrb[0].mxu0
  %v954 = vadd.f32 %v905, %v953
  %v955 = vpop.f32.mrb[0].mxu0
  %v956 = vpop.f32.mrb[0].mxu0
  %v957 = vadd.f32 %v908, %v956
  %v958 = vpop.f32.mrb[0].mxu0
  %959 = vdwg.mxu0
  %v960 = vmax.f32 %v946, 0.0
  %v961 = vmax.f32 %v949, 0.0
  %v962 = vmax.f32 %v954, 0.0
  %v963 = vmax.f32 %v957, 0.0
  %v964 = vpack.c.bf16 %v961, %v960
  %v965 = vpack.c.bf16 %v963, %v962
  %v968 = vunpack.c.l.b16 %v964
  %v969 = vunpack.c.h.b16 %v964
  %v970 = vunpack.c.l.b16 %v965
  %v971 = vunpack.c.h.b16 %v965
  %v972 = vpack.c.b16 %v968, %v968
  %v973 = vpack.c.b16 %v969, %v969
  %v974 = vpack.c.b16 %v970, %v970
  %v975 = vpack.c.b16 %v971, %v971
  %980 = vst [vmem:[%s7] sm:$0xf] %v972
  %981 = vst [vmem:[%s7 + $0x4] sm:$0xf] %v973
  %982 = vst [vmem:[%s7 + $0x8] sm:$0xf] %v974
  %983 = vst [vmem:[%s7 + $0xc] sm:$0xf] %v975
  // Predicated region
  $region30: #{unet_up_forward.1} parent=0 // pred_check
    _
  $region31: #{unet_up_forward.1} parent=0 // pred_check_branch
    %985 = sbr.rel (0) target = $region33
  $region32: #{unet_up_forward.1} parent=0 // pred_region
    _
  $region33: #{unet_up_forward.1} parent=0 // pred_fallthru
    _
  // Predicated region
  $region34: #{unet_up_forward.1} parent=0 // pred_check
    _
  $region35: #{unet_up_forward.1} parent=0 // pred_check_branch
    %987 = sbr.rel (0) target = $region37
  $region36: #{unet_up_forward.1} parent=0 // pred_region
    _
  $region37: #{unet_up_forward.1} parent=0 // pred_fallthru
    _

</llo_original>
